<compile_context>
chip_gen: v6e
topology: v6e:2x2x1
jax: 0.10.0
libtpu: 0.0.40
codegen_flags: <defaults>
</compile_context>

<pallas_src>
import functools

import jax
import jax.numpy as jnp
from jax.experimental import pallas as pl
from jax.experimental.pallas import tpu as pltpu


def generator_kernel(x_ref, w1_ref, b1_ref, w2_ref, b2_ref, o_ref):
    """One (B, TN) output tile of the fused MLP.

    x_ref  : (B, z_dim)      f32   (resident across the grid; cast in-kernel)
    w1_ref : (z_dim, hidden) bf16  (resident across the grid)
    b1_ref : (1, hidden)     f32   (resident across the grid)
    w2_ref : (hidden, TN)    bf16  (tile j of w2)
    b2_ref : (1, TN)         f32   (tile j of b2)
    o_ref  : (B, TN)         f32   (tile j of the output; edge tile is masked)
    """
    # ---- first linear + LeakyReLU(0.1): bf16 MXU dot, f32 accumulate/elementwise ----
    x = x_ref[...].astype(w1_ref.dtype)
    h = jnp.dot(x, w1_ref[...], preferred_element_type=jnp.float32)
    h = h + b1_ref[...]                      # (B, hidden) + (1, hidden)
    h = jnp.where(h >= 0, h, 0.1 * h)        # LeakyReLU(negative_slope=0.1), f32 on VPU
    # ---- second linear (this N-tile) + Tanh ----
    y = jnp.dot(h.astype(w2_ref.dtype), w2_ref[...],
                preferred_element_type=jnp.float32)
    y = y + b2_ref[...]                      # (B, TN) + (1, TN)
    o_ref[...] = jnp.tanh(y).astype(o_ref.dtype)   # tanh on EUP, f32


def default_num_tiles():
    """1 grid step on single-TensorCore parts (v5e/v6e); 2 on v7x (2 TCs/chip)."""
    try:
        kind = jax.devices()[0].device_kind.lower()
    except Exception:
        return 1
    return 2 if ("v7" in kind or "7x" in kind) else 1


def prepare_generator_params(w1, b1, w2, b2, *, n_tiles=1,
                             compute_dtype=jnp.bfloat16):
    """One-time parameter prep.  Call ONCE and reuse the result.

    Pads w2/b2 along the output-feature axis so it splits into `n_tiles`
    lane-dense (multiple-of-128) tiles, and casts the matmul operands to the
    MXU-native compute dtype.  Doing this per-call would move more HBM bytes
    than the kernel itself.
    """
    z_dim, hidden = w1.shape
    img_dim = w2.shape[1]
    if n_tiles <= 1:
        n_tiles = 1
        tn = img_dim                              # single full-extent block, no padding
        n_pad = img_dim
    else:
        tn = pl.cdiv(img_dim, 128 * n_tiles) * 128   # keep lane dim a multiple of 128
        n_pad = tn * n_tiles
    pad = n_pad - img_dim
    w2p = jnp.pad(w2, ((0, 0), (0, pad))) if pad else w2
    b2p = jnp.pad(b2, ((0, pad),)) if pad else b2
    return dict(
        w1=jnp.asarray(w1, compute_dtype),
        b1=jnp.asarray(b1, jnp.float32).reshape(1, hidden),
        w2=jnp.asarray(w2p, compute_dtype),
        b2=jnp.asarray(b2p, jnp.float32).reshape(1, n_pad),
        tn=tn,
        n_tiles=n_tiles,
        img_dim=img_dim,
    )


def generator_forward(x, w1, b1, w2, b2, *, tn, img_dim):
    """x: (B, z_dim) f32. w1/b1/w2/b2: pre-prepped (see prepare_generator_params).

    Returns (B, img_dim) f32 — no trailing slice/copy.
    """
    B, z_dim = x.shape
    hidden = w1.shape[1]
    n_pad = w2.shape[1]
    n_tiles = n_pad // tn

    bytes_accessed = (
        x.size * 4                                         # f32 activations
        + w1.size * w1.dtype.itemsize
        + w2.size * w2.dtype.itemsize
        + b1.size * 4 + b2.size * 4
        + B * img_dim * 4                                  # f32 output write
    )
    cost = pl.CostEstimate(
        flops=2 * B * (z_dim * hidden * n_tiles + hidden * n_pad),
        transcendentals=B * n_pad,
        bytes_accessed=bytes_accessed,
    )

    return pl.pallas_call(
        generator_kernel,
        out_shape=jax.ShapeDtypeStruct((B, img_dim), jnp.float32),
        grid_spec=pltpu.PrefetchScalarGridSpec(
            num_scalar_prefetch=0,
            grid=(n_tiles,),
            in_specs=[
                pl.BlockSpec((B, z_dim), lambda j: (0, 0)),        # x resident
                pl.BlockSpec((z_dim, hidden), lambda j: (0, 0)),   # w1 resident
                pl.BlockSpec((1, hidden), lambda j: (0, 0)),       # b1 resident
                pl.BlockSpec((hidden, tn), lambda j: (0, j)),      # w2 tile
                pl.BlockSpec((1, tn), lambda j: (0, j)),           # b2 tile
            ],
            # Lane-dense output tile; the ragged last tile (if any) is masked.
            out_specs=pl.BlockSpec((B, tn), lambda j: (0, j)),
        ),
        compiler_params=pltpu.CompilerParams(
            # Independent output tiles -> shard across TensorCores on v7x.
            dimension_semantics=("parallel",),
        ),
        cost_estimate=cost,
    )(x, w1, b1, w2, b2)


def reference_forward_bf16(x, w1, b1, w2, b2):
    """Pure-JAX reference mimicking the kernel's bf16-operand / f32-accumulate dots."""
    h = jnp.dot(x.astype(jnp.bfloat16), w1.astype(jnp.bfloat16),
                preferred_element_type=jnp.float32) + b1
    h = jnp.where(h >= 0, h, 0.1 * h)
    y = jnp.dot(h.astype(jnp.bfloat16), w2.astype(jnp.bfloat16),
                preferred_element_type=jnp.float32) + b2
    return jnp.tanh(y)


def reference_forward_f32(x, w1, b1, w2, b2):
    h = x @ w1 + b1
    h = jnp.where(h >= 0, h, 0.1 * h)
    return jnp.tanh(h @ w2 + b2)


if __name__ == "__main__":
    z_dim = 128
    hidden = 256
    img_dim = 784          # 28*28 MNIST, as in the typical GAN setup
    batch = 8              # small demo batch; B >= 128 amortizes the weight DMA

    key = jax.random.PRNGKey(0)
    kx, k1, k2, k3, k4 = jax.random.split(key, 5)

    # Deterministic parameter init (uniform, PyTorch default Linear init scale).
    x = jax.random.normal(kx, (batch, z_dim), dtype=jnp.float32)
    lim1 = 1.0 / jnp.sqrt(z_dim)
    w1 = jax.random.uniform(k1, (z_dim, hidden), jnp.float32, -lim1, lim1)
    b1 = jax.random.uniform(k2, (hidden,), jnp.float32, -lim1, lim1)
    lim2 = 1.0 / jnp.sqrt(hidden)
    w2 = jax.random.uniform(k3, (hidden, img_dim), jnp.float32, -lim2, lim2)
    b2 = jax.random.uniform(k4, (img_dim,), jnp.float32, -lim2, lim2)

    # One-time prep (pad + cast), hoisted out of the per-call path.
    n_tiles = default_num_tiles()
    params = prepare_generator_params(w1, b1, w2, b2, n_tiles=n_tiles)

    fwd = jax.jit(functools.partial(generator_forward,
                                    tn=params["tn"], img_dim=params["img_dim"]))
    out = fwd(x, params["w1"], params["b1"], params["w2"], params["b2"])
    out = jax.block_until_ready(out)
    assert out.shape == (batch, img_dim)

    # Tight check vs. a reference using the same bf16 matmul operands.
    ref_bf16 = reference_forward_bf16(x, w1, b1, w2, b2)
    assert jnp.allclose(out, ref_bf16, atol=2e-3, rtol=2e-3), "mismatch vs bf16 reference"

    # Loose sanity check vs. the full-f32 reference (bf16 weight quantization error).
    ref_f32 = reference_forward_f32(x, w1, b1, w2, b2)
    assert jnp.allclose(out, ref_f32, atol=1e-1), "mismatch vs f32 reference"

    print("KERNEL_OK")
</pallas_src>

<mosaic_0001>
module attributes {stable_mosaic.version = 11 : i64} {
  func.func @generator_kernel(%arg0: i32, %arg1: memref<8x128xf32, #tpu.memory_space<vmem>>, %arg2: memref<128x256xbf16, #tpu.memory_space<vmem>>, %arg3: memref<1x256xf32, #tpu.memory_space<vmem>>, %arg4: memref<256x784xbf16, #tpu.memory_space<vmem>>, %arg5: memref<1x784xf32, #tpu.memory_space<vmem>>, %arg6: memref<8x784xf32, #tpu.memory_space<vmem>>) attributes {dimension_semantics = [#tpu.dimension_semantics<parallel>], iteration_bounds = array<i64: 1>, scalar_prefetch = 0 : i64, scratch_operands = 0 : i64, tpu.core_type = #tpu.core_type<tc>, window_params = [{pipeline_mode = #tpu.pipeline_mode<synchronous>, transform_indices = @transform_0, window_bounds = array<i64: 8, 128>}, {pipeline_mode = #tpu.pipeline_mode<synchronous>, transform_indices = @transform_1, window_bounds = array<i64: 128, 256>}, {pipeline_mode = #tpu.pipeline_mode<synchronous>, transform_indices = @transform_2, window_bounds = array<i64: 1, 256>}, {transform_indices = @transform_3, window_bounds = array<i64: 256, 784>}, {transform_indices = @transform_4, window_bounds = array<i64: 1, 784>}, {transform_indices = @transform_5, window_bounds = array<i64: 8, 784>}]} {
    %c0 = arith.constant 0 : index
    %c0_0 = arith.constant 0 : index
    %0 = vector.load %arg1[%c0, %c0_0] : memref<8x128xf32, #tpu.memory_space<vmem>>, vector<8x128xf32>
    %1 = arith.truncf %0 : vector<8x128xf32> to vector<8x128xbf16>
    %c0_1 = arith.constant 0 : index
    %c0_2 = arith.constant 0 : index
    %2 = vector.load %arg2[%c0_1, %c0_2] : memref<128x256xbf16, #tpu.memory_space<vmem>>, vector<128x256xbf16>
    %cst = arith.constant dense<0.000000e+00> : vector<8x256xf32>
    %3 = tpu.matmul %1, %2, %cst {dimension_numbers = #tpu.dot_dimension_numbers<[1], [0], [0], [1], [0, 0, 1, 1], [], []>} : vector<8x128xbf16>, vector<128x256xbf16>, vector<8x256xf32> -> vector<8x256xf32>
    %c0_3 = arith.constant 0 : index
    %c0_4 = arith.constant 0 : index
    %4 = vector.load %arg3[%c0_3, %c0_4] : memref<1x256xf32, #tpu.memory_space<vmem>>, vector<1x256xf32>
    %5 = vector.broadcast %4 : vector<1x256xf32> to vector<8x256xf32>
    %6 = arith.addf %3, %5 : vector<8x256xf32>
    %cst_5 = arith.constant 0.000000e+00 : f32
    %7 = vector.broadcast %cst_5 : f32 to vector<8x256xf32>
    %8 = arith.cmpf oge, %6, %7 : vector<8x256xf32>
    %cst_6 = arith.constant 1.000000e-01 : f32
    %9 = vector.broadcast %cst_6 : f32 to vector<8x256xf32>
    %10 = arith.mulf %9, %6 : vector<8x256xf32>
    %11 = arith.select %8, %6, %10 : vector<8x256xi1>, vector<8x256xf32>
    %12 = arith.truncf %11 : vector<8x256xf32> to vector<8x256xbf16>
    %c0_7 = arith.constant 0 : index
    %c0_8 = arith.constant 0 : index
    %13 = vector.load %arg4[%c0_7, %c0_8] : memref<256x784xbf16, #tpu.memory_space<vmem>>, vector<256x784xbf16>
    %cst_9 = arith.constant dense<0.000000e+00> : vector<8x784xf32>
    %14 = tpu.matmul %12, %13, %cst_9 {dimension_numbers = #tpu.dot_dimension_numbers<[1], [0], [0], [1], [0, 0, 1, 1], [], []>} : vector<8x256xbf16>, vector<256x784xbf16>, vector<8x784xf32> -> vector<8x784xf32>
    %c0_10 = arith.constant 0 : index
    %c0_11 = arith.constant 0 : index
    %15 = vector.load %arg5[%c0_10, %c0_11] : memref<1x784xf32, #tpu.memory_space<vmem>>, vector<1x784xf32>
    %16 = vector.broadcast %15 : vector<1x784xf32> to vector<8x784xf32>
    %17 = arith.addf %14, %16 : vector<8x784xf32>
    %18 = math.tanh %17 : vector<8x784xf32>
    %c0_12 = arith.constant 0 : index
    %c0_13 = arith.constant 0 : index
    %19 = vector.load %arg6[%c0_12, %c0_13] : memref<8x784xf32, #tpu.memory_space<vmem>>, vector<8x784xf32>
    tpu.vector_store %arg6[%c0_12, %c0_13], %18 {strides = array<i32>} : memref<8x784xf32, #tpu.memory_space<vmem>>, vector<8x784xf32>,
    return
  }
  func.func @transform_0(%arg0: i32) -> (i32, i32) {
    %c0_i32 = arith.constant 0 : i32
    %c0_i32_0 = arith.constant 0 : i32
    %c0_i32_1 = arith.constant 0 : i32
    return %c0_i32, %c0_i32_0 : i32, i32
  }
  func.func @transform_1(%arg0: i32) -> (i32, i32) {
    %c0_i32 = arith.constant 0 : i32
    %c0_i32_0 = arith.constant 0 : i32
    %c0_i32_1 = arith.constant 0 : i32
    return %c0_i32, %c0_i32_0 : i32, i32
  }
  func.func @transform_2(%arg0: i32) -> (i32, i32) {
    %c0_i32 = arith.constant 0 : i32
    %c0_i32_0 = arith.constant 0 : i32
    %c0_i32_1 = arith.constant 0 : i32
    return %c0_i32, %c0_i32_0 : i32, i32
  }
  func.func @transform_3(%arg0: i32) -> (i32, i32) {
    %c0_i32 = arith.constant 0 : i32
    %c0_i32_0 = arith.constant 0 : i32
    return %c0_i32, %arg0 : i32, i32
  }
  func.func @transform_4(%arg0: i32) -> (i32, i32) {
    %c0_i32 = arith.constant 0 : i32
    %c0_i32_0 = arith.constant 0 : i32
    return %c0_i32, %arg0 : i32, i32
  }
  func.func @transform_5(%arg0: i32) -> (i32, i32) {
    %c0_i32 = arith.constant 0 : i32
    %c0_i32_0 = arith.constant 0 : i32
    return %c0_i32, %arg0 : i32, i32
  }
}

</mosaic_0001>

<llo_original>
// kernel: generator_forward.1
$region0: #{generator_forward.1}
  #allocation0 [shape = 'u32[]', space=smem, size = 0x4, offset = 0x4, fixed_abs, tag = 'smem constant byte address 0x4 - core index']
  #allocation1 [shape = 'u32[144,128]{1,0:T(1,128)}', space=vmem, size = 0x12000, scoped, tag = 'internal scratch']
  %s0 = inlined_call_operand.vmem [shape: f32[8,128], index: 0, kind: input, shape index: {}]
  %s1 = inlined_call_operand.vmem [shape: bf16[128,256], index: 1, kind: input, shape index: {}]
  %s2 = inlined_call_operand.vmem [shape: f32[1,256], index: 2, kind: input, shape index: {}]
  %s3 = inlined_call_operand.vmem [shape: bf16[256,784], index: 3, kind: input, shape index: {}]
  %s4 = inlined_call_operand.vmem [shape: f32[1,784], index: 4, kind: input, shape index: {}]
  %s5 = inlined_call_operand.hbm [shape: f32[8,784], index: 5, kind: output, shape index: {}]
  %s6 = sld [smem:[#allocation0]]
  $region30: #{generator_forward.1} parent=0
    _
  %s8 = ssub.s32 1, %s6
  %s9 = scalar_select 0, %s8, %s6
  $region1: #{generator_forward.1} parent=0
    #allocation2 [shape = 'u8[28672]{0}', space=vmem, size = 0x7000, scoped, tag = 'output window, operand 0, single buffered']
    #allocation3 [shape = 's32[1]{0}', space=sflag, size = 0x4, scoped, tag = 'scoped memory for generator_forward.1']
    %10 = vsyncpa [#allocation3], 0
    // Predicated region
    $region2: #{generator_forward.1} parent=1 // pred_check
      _
    $region3: #{generator_forward.1} parent=1 // pred_check_branch
      %12 = sbr.rel (0) target = $region5
    $region4: #{generator_forward.1} parent=1 // pred_region
      _
    $region5: #{generator_forward.1} parent=1 // pred_fallthru
      _
    // Predicated region
    $region6: #{generator_forward.1} parent=1 // pred_check
      _
    $region7: #{generator_forward.1} parent=1 // pred_check_branch
      %14 = sbr.rel (0) target = $region9
    $region8: #{generator_forward.1} parent=1 // pred_region
      _
    $region9: #{generator_forward.1} parent=1 // pred_fallthru
      _
    // Predicated region
    $region10: #{generator_forward.1} parent=1 // pred_check
      _
    $region11: #{generator_forward.1} parent=1 // pred_check_branch
      %16 = sbr.rel (0) target = $region13
    $region12: #{generator_forward.1} parent=1 // pred_region
      _
    $region13: #{generator_forward.1} parent=1 // pred_fallthru
      _
    // Predicated region
    $region14: #{generator_forward.1} parent=1 // pred_check
      _
    $region15: #{generator_forward.1} parent=1 // pred_check_branch
      %18 = sbr.rel (0) target = $region17
    $region16: #{generator_forward.1} parent=1 // pred_region
      _
    $region17: #{generator_forward.1} parent=1 // pred_fallthru
      _
    // Predicated region
    $region18: #{generator_forward.1} parent=1 // pred_check
      _
    $region19: #{generator_forward.1} parent=1 // pred_check_branch
      %20 = sbr.rel (0) target = $region21
    $region20: #{generator_forward.1} parent=1 // pred_region
      _
    $region21: #{generator_forward.1} parent=1 // pred_fallthru
      _
    %v22 = vld [vmem:[%s0] sm:$0xff]
    %v23 = vpack.c.bf16 %v22, %v22
    %v24 = vld [vmem:[%s1] sm:$0xff]
    %v25 = vld [vmem:[%s1 + $0x8] sm:$0xff]
    %v26 = vld [vmem:[%s1 + $0x10] sm:$0xff]
    %v27 = vld [vmem:[%s1 + $0x18] sm:$0xff]
    %v28 = vld [vmem:[%s1 + $0x20] sm:$0xff]
    %v29 = vld [vmem:[%s1 + $0x28] sm:$0xff]
    %v30 = vld [vmem:[%s1 + $0x30] sm:$0xff]
    %v31 = vld [vmem:[%s1 + $0x38] sm:$0xff]
    %v32 = vld [vmem:[%s1 + $0x40] sm:$0xff]
    %v33 = vld [vmem:[%s1 + $0x48] sm:$0xff]
    %v34 = vld [vmem:[%s1 + $0x50] sm:$0xff]
    %v35 = vld [vmem:[%s1 + $0x58] sm:$0xff]
    %v36 = vld [vmem:[%s1 + $0x60] sm:$0xff]
    %v37 = vld [vmem:[%s1 + $0x68] sm:$0xff]
    %v38 = vld [vmem:[%s1 + $0x70] sm:$0xff]
    %v39 = vld [vmem:[%s1 + $0x78] sm:$0xff]
    %v40 = vld [vmem:[%s2] sm:$0x3]
    %v42 = vlaneseq
    %v43 = vshrl.u32 %v42, 7
    %v44 = vsub.s32 0, %v43
    %v45 = vrot.slane %v40, %v44
    %v46 = vlaneseq
    %v47 = vshrl.u32 %v46, 7
    %v48 = vsub.s32 1, %v47
    %v49 = vrot.slane %v40, %v48
    %v68 = vunpack.c.l.b16 %v24
    %v69 = vunpack.c.h.b16 %v24
    %v70 = vunpack.c.l.b16 %v25
    %v71 = vunpack.c.h.b16 %v25
    %v72 = vunpack.c.l.b16 %v26
    %v73 = vunpack.c.h.b16 %v26
    %v74 = vunpack.c.l.b16 %v27
    %v75 = vunpack.c.h.b16 %v27
    %v76 = vunpack.c.l.b16 %v28
    %v77 = vunpack.c.h.b16 %v28
    %v78 = vunpack.c.l.b16 %v29
    %v79 = vunpack.c.h.b16 %v29
    %v80 = vunpack.c.l.b16 %v30
    %v81 = vunpack.c.h.b16 %v30
    %v82 = vunpack.c.l.b16 %v31
    %v83 = vunpack.c.h.b16 %v31
    %v84 = vunpack.c.l.b16 %v32
    %v85 = vunpack.c.h.b16 %v32
    %v86 = vunpack.c.l.b16 %v33
    %v87 = vunpack.c.h.b16 %v33
    %v88 = vunpack.c.l.b16 %v34
    %v89 = vunpack.c.h.b16 %v34
    %v90 = vunpack.c.l.b16 %v35
    %v91 = vunpack.c.h.b16 %v35
    %v92 = vunpack.c.l.b16 %v36
    %v93 = vunpack.c.h.b16 %v36
    %v94 = vunpack.c.l.b16 %v37
    %v95 = vunpack.c.h.b16 %v37
    %v96 = vunpack.c.l.b16 %v38
    %v97 = vunpack.c.h.b16 %v38
    %v98 = vunpack.c.l.b16 %v39
    %v99 = vunpack.c.h.b16 %v39
    %v100 = vpack.c.b16 %v70, %v68
    %v101 = vpack.c.b16 %v71, %v69
    %v102 = vpack.c.b16 %v74, %v72
    %v103 = vpack.c.b16 %v75, %v73
    %v104 = vpack.c.b16 %v78, %v76
    %v105 = vpack.c.b16 %v79, %v77
    %v106 = vpack.c.b16 %v82, %v80
    %v107 = vpack.c.b16 %v83, %v81
    %v108 = vpack.c.b16 %v86, %v84
    %v109 = vpack.c.b16 %v87, %v85
    %v110 = vpack.c.b16 %v90, %v88
    %v111 = vpack.c.b16 %v91, %v89
    %v112 = vpack.c.b16 %v94, %v92
    %v113 = vpack.c.b16 %v95, %v93
    %v114 = vpack.c.b16 %v98, %v96
    %v115 = vpack.c.b16 %v99, %v97
    %132 = vmatprep.subr.bf16.mxu0 %v115
    %133 = vmatpush1.bf16.msra.mxu0 %v114
    %134 = vmatprep.subr.bf16.mxu0 %v113
    %135 = vmatpush1.bf16.msra.mxu0 %v112
    %136 = vmatprep.subr.bf16.mxu0 %v111
    %137 = vmatpush1.bf16.msra.mxu0 %v110
    %138 = vmatprep.subr.bf16.mxu0 %v109
    %139 = vmatpush1.bf16.msra.mxu0 %v108
    %140 = vmatprep.subr.bf16.mxu0 %v107
    %141 = vmatpush1.bf16.msra.mxu0 %v106
    %142 = vmatprep.subr.bf16.mxu0 %v105
    %143 = vmatpush1.bf16.msra.mxu0 %v104
    %144 = vmatprep.subr.bf16.mxu0 %v103
    %145 = vmatpush1.bf16.msra.mxu0 %v102
    %146 = vmatprep.subr.bf16.mxu0 %v101
    %147 = vmatpush1.bf16.msra.mxu0 %v100
    %148 = vmatprep.subr.bf16.mxu0 0
    %149 = vmatpush2.bf16.msra.mxu0 0
    %150 = vmatprep.subr.bf16.mxu0 0
    %151 = vmatpush2.bf16.msra.mxu0 0
    %152 = vmatprep.subr.bf16.mxu0 0
    %153 = vmatpush2.bf16.msra.mxu0 0
    %154 = vmatprep.subr.bf16.mxu0 0
    %155 = vmatpush2.bf16.msra.mxu0 0
    %156 = vmatprep.subr.bf16.mxu0 0
    %157 = vmatpush2.bf16.msra.mxu0 0
    %158 = vmatprep.subr.bf16.mxu0 0
    %159 = vmatpush2.bf16.msra.mxu0 0
    %160 = vmatprep.subr.bf16.mxu0 0
    %161 = vmatpush2.bf16.msra.mxu0 0
    %162 = vmatprep.subr.bf16.mxu0 0
    %163 = vmatpush2.bf16.msra.mxu0 0
    %164 = vmatprep.mubr.bf16.mxu0 0
    %165 = vmatmul.mubr.bf16.gmra.mxu0 %v23
    %v166 = vpop.f32.mrf.mxu0
    %v167 = vadd.f32 %v45, %v166
    %v168 = vpop.f32.mrf.mxu0
    %v169 = vadd.f32 %v49, %v168
    %v170 = vpop.f32.mrf.mxu0
    %v171 = vpop.f32.mrf.mxu0
    %172 = vdwg.mxu0
    %vm173 = vcmp.ge.f32.partialorder %v167, 0.0
    %vm174 = vcmp.ge.f32.partialorder %v169, 0.0
    %v175 = vmul.f32 %v167, 0.1
    %v176 = vmul.f32 %v169, 0.1
    %v177 = vsel %vm173, %v167, %v175
    %v178 = vsel %vm174, %v169, %v176
    %v179 = vpack.c.bf16 %v177, %v177
    %v180 = vpack.c.bf16 %v178, %v178
    %v181 = vld [vmem:[%s3] sm:$0xff]
    %v182 = vld [vmem:[%s3 + $0x8] sm:$0xff]
    %v183 = vld [vmem:[%s3 + $0x10] sm:$0xff]
    %v184 = vld [vmem:[%s3 + $0x18] sm:$0xf]
    %v185 = vld [vmem:[%s3 + $0x1c] sm:$0xff]
    %v186 = vld [vmem:[%s3 + $0x24] sm:$0xff]
    %v187 = vld [vmem:[%s3 + $0x2c] sm:$0xff]
    %v188 = vld [vmem:[%s3 + $0x34] sm:$0xf]
    %v189 = vld [vmem:[%s3 + $0x38] sm:$0xff]
    %v190 = vld [vmem:[%s3 + $0x40] sm:$0xff]
    %v191 = vld [vmem:[%s3 + $0x48] sm:$0xff]
    %v192 = vld [vmem:[%s3 + $0x50] sm:$0xf]
    %v193 = vld [vmem:[%s3 + $0x54] sm:$0xff]
    %v194 = vld [vmem:[%s3 + $0x5c] sm:$0xff]
    %v195 = vld [vmem:[%s3 + $0x64] sm:$0xff]
    %v196 = vld [vmem:[%s3 + $0x6c] sm:$0xf]
    %v197 = vld [vmem:[%s3 + $0x70] sm:$0xff]
    %v198 = vld [vmem:[%s3 + $0x78] sm:$0xff]
    %v199 = vld [vmem:[%s3 + $0x80] sm:$0xff]
    %v200 = vld [vmem:[%s3 + $0x88] sm:$0xf]
    %v201 = vld [vmem:[%s3 + $0x8c] sm:$0xff]
    %v202 = vld [vmem:[%s3 + $0x94] sm:$0xff]
    %v203 = vld [vmem:[%s3 + $0x9c] sm:$0xff]
    %v204 = vld [vmem:[%s3 + $0xa4] sm:$0xf]
    %v205 = vld [vmem:[%s3 + $0xa8] sm:$0xff]
    %v206 = vld [vmem:[%s3 + $0xb0] sm:$0xff]
    %v207 = vld [vmem:[%s3 + $0xb8] sm:$0xff]
    %v208 = vld [vmem:[%s3 + $0xc0] sm:$0xf]
    %v209 = vld [vmem:[%s3 + $0xc4] sm:$0xff]
    %v210 = vld [vmem:[%s3 + $0xcc] sm:$0xff]
    %v211 = vld [vmem:[%s3 + $0xd4] sm:$0xff]
    %v212 = vld [vmem:[%s3 + $0xdc] sm:$0xf]
    %v213 = vld [vmem:[%s3 + $0xe0] sm:$0xff]
    %v214 = vld [vmem:[%s3 + $0xe8] sm:$0xff]
    %v215 = vld [vmem:[%s3 + $0xf0] sm:$0xff]
    %v216 = vld [vmem:[%s3 + $0xf8] sm:$0xf]
    %v217 = vld [vmem:[%s3 + $0xfc] sm:$0xff]
    %v218 = vld [vmem:[%s3 + $0x104] sm:$0xff]
    %v219 = vld [vmem:[%s3 + $0x10c] sm:$0xff]
    %v220 = vld [vmem:[%s3 + $0x114] sm:$0xf]
    %v221 = vld [vmem:[%s3 + $0x118] sm:$0xff]
    %v222 = vld [vmem:[%s3 + $0x120] sm:$0xff]
    %v223 = vld [vmem:[%s3 + $0x128] sm:$0xff]
    %v224 = vld [vmem:[%s3 + $0x130] sm:$0xf]
    %v225 = vld [vmem:[%s3 + $0x134] sm:$0xff]
    %v226 = vld [vmem:[%s3 + $0x13c] sm:$0xff]
    %v227 = vld [vmem:[%s3 + $0x144] sm:$0xff]
    %v228 = vld [vmem:[%s3 + $0x14c] sm:$0xf]
    %v229 = vld [vmem:[%s3 + $0x150] sm:$0xff]
    %v230 = vld [vmem:[%s3 + $0x158] sm:$0xff]
    %v231 = vld [vmem:[%s3 + $0x160] sm:$0xff]
    %v232 = vld [vmem:[%s3 + $0x168] sm:$0xf]
    %v233 = vld [vmem:[%s3 + $0x16c] sm:$0xff]
    %v234 = vld [vmem:[%s3 + $0x174] sm:$0xff]
    %v235 = vld [vmem:[%s3 + $0x17c] sm:$0xff]
    %v236 = vld [vmem:[%s3 + $0x184] sm:$0xf]
    %v237 = vld [vmem:[%s3 + $0x188] sm:$0xff]
    %v238 = vld [vmem:[%s3 + $0x190] sm:$0xff]
    %v239 = vld [vmem:[%s3 + $0x198] sm:$0xff]
    %v240 = vld [vmem:[%s3 + $0x1a0] sm:$0xf]
    %v241 = vld [vmem:[%s3 + $0x1a4] sm:$0xff]
    %v242 = vld [vmem:[%s3 + $0x1ac] sm:$0xff]
    %v243 = vld [vmem:[%s3 + $0x1b4] sm:$0xff]
    %v244 = vld [vmem:[%s3 + $0x1bc] sm:$0xf]
    %v245 = vld [vmem:[%s3 + $0x1c0] sm:$0xff]
    %v246 = vld [vmem:[%s3 + $0x1c8] sm:$0xff]
    %v247 = vld [vmem:[%s3 + $0x1d0] sm:$0xff]
    %v248 = vld [vmem:[%s3 + $0x1d8] sm:$0xf]
    %v249 = vld [vmem:[%s3 + $0x1dc] sm:$0xff]
    %v250 = vld [vmem:[%s3 + $0x1e4] sm:$0xff]
    %v251 = vld [vmem:[%s3 + $0x1ec] sm:$0xff]
    %v252 = vld [vmem:[%s3 + $0x1f4] sm:$0xf]
    %v253 = vld [vmem:[%s3 + $0x1f8] sm:$0xff]
    %v254 = vld [vmem:[%s3 + $0x200] sm:$0xff]
    %v255 = vld [vmem:[%s3 + $0x208] sm:$0xff]
    %v256 = vld [vmem:[%s3 + $0x210] sm:$0xf]
    %v257 = vld [vmem:[%s3 + $0x214] sm:$0xff]
    %v258 = vld [vmem:[%s3 + $0x21c] sm:$0xff]
    %v259 = vld [vmem:[%s3 + $0x224] sm:$0xff]
    %v260 = vld [vmem:[%s3 + $0x22c] sm:$0xf]
    %v261 = vld [vmem:[%s3 + $0x230] sm:$0xff]
    %v262 = vld [vmem:[%s3 + $0x238] sm:$0xff]
    %v263 = vld [vmem:[%s3 + $0x240] sm:$0xff]
    %v264 = vld [vmem:[%s3 + $0x248] sm:$0xf]
    %v265 = vld [vmem:[%s3 + $0x24c] sm:$0xff]
    %v266 = vld [vmem:[%s3 + $0x254] sm:$0xff]
    %v267 = vld [vmem:[%s3 + $0x25c] sm:$0xff]
    %v268 = vld [vmem:[%s3 + $0x264] sm:$0xf]
    %v269 = vld [vmem:[%s3 + $0x268] sm:$0xff]
    %v270 = vld [vmem:[%s3 + $0x270] sm:$0xff]
    %v271 = vld [vmem:[%s3 + $0x278] sm:$0xff]
    %v272 = vld [vmem:[%s3 + $0x280] sm:$0xf]
    %v273 = vld [vmem:[%s3 + $0x284] sm:$0xff]
    %v274 = vld [vmem:[%s3 + $0x28c] sm:$0xff]
    %v275 = vld [vmem:[%s3 + $0x294] sm:$0xff]
    %v276 = vld [vmem:[%s3 + $0x29c] sm:$0xf]
    %v277 = vld [vmem:[%s3 + $0x2a0] sm:$0xff]
    %v278 = vld [vmem:[%s3 + $0x2a8] sm:$0xff]
    %v279 = vld [vmem:[%s3 + $0x2b0] sm:$0xff]
    %v280 = vld [vmem:[%s3 + $0x2b8] sm:$0xf]
    %v281 = vld [vmem:[%s3 + $0x2bc] sm:$0xff]
    %v282 = vld [vmem:[%s3 + $0x2c4] sm:$0xff]
    %v283 = vld [vmem:[%s3 + $0x2cc] sm:$0xff]
    %v284 = vld [vmem:[%s3 + $0x2d4] sm:$0xf]
    %v285 = vld [vmem:[%s3 + $0x2d8] sm:$0xff]
    %v286 = vld [vmem:[%s3 + $0x2e0] sm:$0xff]
    %v287 = vld [vmem:[%s3 + $0x2e8] sm:$0xff]
    %v288 = vld [vmem:[%s3 + $0x2f0] sm:$0xf]
    %v289 = vld [vmem:[%s3 + $0x2f4] sm:$0xff]
    %v290 = vld [vmem:[%s3 + $0x2fc] sm:$0xff]
    %v291 = vld [vmem:[%s3 + $0x304] sm:$0xff]
    %v292 = vld [vmem:[%s3 + $0x30c] sm:$0xf]
    %v293 = vld [vmem:[%s3 + $0x310] sm:$0xff]
    %v294 = vld [vmem:[%s3 + $0x318] sm:$0xff]
    %v295 = vld [vmem:[%s3 + $0x320] sm:$0xff]
    %v296 = vld [vmem:[%s3 + $0x328] sm:$0xf]
    %v297 = vld [vmem:[%s3 + $0x32c] sm:$0xff]
    %v298 = vld [vmem:[%s3 + $0x334] sm:$0xff]
    %v299 = vld [vmem:[%s3 + $0x33c] sm:$0xff]
    %v300 = vld [vmem:[%s3 + $0x344] sm:$0xf]
    %v301 = vld [vmem:[%s3 + $0x348] sm:$0xff]
    %v302 = vld [vmem:[%s3 + $0x350] sm:$0xff]
    %v303 = vld [vmem:[%s3 + $0x358] sm:$0xff]
    %v304 = vld [vmem:[%s3 + $0x360] sm:$0xf]
    %v305 = vld [vmem:[%s3 + $0x364] sm:$0xff]
    %v306 = vld [vmem:[%s3 + $0x36c] sm:$0xff]
    %v307 = vld [vmem:[%s3 + $0x374] sm:$0xff]
    %v308 = vld [vmem:[%s3 + $0x37c] sm:$0xf]
    %v309 = vld [vmem:[%s4] sm:$0x7f]
    %v311 = vlaneseq
    %v312 = vshrl.u32 %v311, 7
    %v313 = vsub.s32 0, %v312
    %v314 = vrot.slane %v309, %v313
    %v315 = vlaneseq
    %v316 = vshrl.u32 %v315, 7
    %v317 = vsub.s32 1, %v316
    %v318 = vrot.slane %v309, %v317
    %v319 = vlaneseq
    %v320 = vshrl.u32 %v319, 7
    %v321 = vsub.s32 2, %v320
    %v322 = vrot.slane %v309, %v321
    %v323 = vlaneseq
    %v324 = vshrl.u32 %v323, 7
    %v325 = vsub.s32 3, %v324
    %v326 = vrot.slane %v309, %v325
    %v327 = vlaneseq
    %v328 = vshrl.u32 %v327, 7
    %v329 = vsub.s32 4, %v328
    %v330 = vrot.slane %v309, %v329
    %v331 = vlaneseq
    %v332 = vshrl.u32 %v331, 7
    %v333 = vsub.s32 5, %v332
    %v334 = vrot.slane %v309, %v333
    %v335 = vlaneseq
    %v336 = vshrl.u32 %v335, 7
    %v337 = vsub.s32 6, %v336
    %v338 = vrot.slane %v309, %v337
    %v474 = vunpack.c.l.b16 %v181
    %v475 = vunpack.c.h.b16 %v181
    %v476 = vunpack.c.l.b16 %v182
    %v477 = vunpack.c.h.b16 %v182
    %v478 = vunpack.c.l.b16 %v183
    %v479 = vunpack.c.h.b16 %v183
    %v480 = vunpack.c.l.b16 %v184
    %v481 = vunpack.c.l.b16 %v185
    %v482 = vunpack.c.h.b16 %v185
    %v483 = vunpack.c.l.b16 %v186
    %v484 = vunpack.c.h.b16 %v186
    %v485 = vunpack.c.l.b16 %v187
    %v486 = vunpack.c.h.b16 %v187
    %v487 = vunpack.c.l.b16 %v188
    %v488 = vunpack.c.l.b16 %v189
    %v489 = vunpack.c.h.b16 %v189
    %v490 = vunpack.c.l.b16 %v190
    %v491 = vunpack.c.h.b16 %v190
    %v492 = vunpack.c.l.b16 %v191
    %v493 = vunpack.c.h.b16 %v191
    %v494 = vunpack.c.l.b16 %v192
    %v495 = vunpack.c.l.b16 %v193
    %v496 = vunpack.c.h.b16 %v193
    %v497 = vunpack.c.l.b16 %v194
    %v498 = vunpack.c.h.b16 %v194
    %v499 = vunpack.c.l.b16 %v195
    %v500 = vunpack.c.h.b16 %v195
    %v501 = vunpack.c.l.b16 %v196
    %v502 = vunpack.c.l.b16 %v197
    %v503 = vunpack.c.h.b16 %v197
    %v504 = vunpack.c.l.b16 %v198
    %v505 = vunpack.c.h.b16 %v198
    %v506 = vunpack.c.l.b16 %v199
    %v507 = vunpack.c.h.b16 %v199
    %v508 = vunpack.c.l.b16 %v200
    %v509 = vunpack.c.l.b16 %v201
    %v510 = vunpack.c.h.b16 %v201
    %v511 = vunpack.c.l.b16 %v202
    %v512 = vunpack.c.h.b16 %v202
    %v513 = vunpack.c.l.b16 %v203
    %v514 = vunpack.c.h.b16 %v203
    %v515 = vunpack.c.l.b16 %v204
    %v516 = vunpack.c.l.b16 %v205
    %v517 = vunpack.c.h.b16 %v205
    %v518 = vunpack.c.l.b16 %v206
    %v519 = vunpack.c.h.b16 %v206
    %v520 = vunpack.c.l.b16 %v207
    %v521 = vunpack.c.h.b16 %v207
    %v522 = vunpack.c.l.b16 %v208
    %v523 = vunpack.c.l.b16 %v209
    %v524 = vunpack.c.h.b16 %v209
    %v525 = vunpack.c.l.b16 %v210
    %v526 = vunpack.c.h.b16 %v210
    %v527 = vunpack.c.l.b16 %v211
    %v528 = vunpack.c.h.b16 %v211
    %v529 = vunpack.c.l.b16 %v212
    %v530 = vunpack.c.l.b16 %v213
    %v531 = vunpack.c.h.b16 %v213
    %v532 = vunpack.c.l.b16 %v214
    %v533 = vunpack.c.h.b16 %v214
    %v534 = vunpack.c.l.b16 %v215
    %v535 = vunpack.c.h.b16 %v215
    %v536 = vunpack.c.l.b16 %v216
    %v537 = vunpack.c.l.b16 %v217
    %v538 = vunpack.c.h.b16 %v217
    %v539 = vunpack.c.l.b16 %v218
    %v540 = vunpack.c.h.b16 %v218
    %v541 = vunpack.c.l.b16 %v219
    %v542 = vunpack.c.h.b16 %v219
    %v543 = vunpack.c.l.b16 %v220
    %v544 = vunpack.c.l.b16 %v221
    %v545 = vunpack.c.h.b16 %v221
    %v546 = vunpack.c.l.b16 %v222
    %v547 = vunpack.c.h.b16 %v222
    %v548 = vunpack.c.l.b16 %v223
    %v549 = vunpack.c.h.b16 %v223
    %v550 = vunpack.c.l.b16 %v224
    %v551 = vunpack.c.l.b16 %v225
    %v552 = vunpack.c.h.b16 %v225
    %v553 = vunpack.c.l.b16 %v226
    %v554 = vunpack.c.h.b16 %v226
    %v555 = vunpack.c.l.b16 %v227
    %v556 = vunpack.c.h.b16 %v227
    %v557 = vunpack.c.l.b16 %v228
    %v558 = vunpack.c.l.b16 %v229
    %v559 = vunpack.c.h.b16 %v229
    %v560 = vunpack.c.l.b16 %v230
    %v561 = vunpack.c.h.b16 %v230
    %v562 = vunpack.c.l.b16 %v231
    %v563 = vunpack.c.h.b16 %v231
    %v564 = vunpack.c.l.b16 %v232
    %v565 = vunpack.c.l.b16 %v233
    %v566 = vunpack.c.h.b16 %v233
    %v567 = vunpack.c.l.b16 %v234
    %v568 = vunpack.c.h.b16 %v234
    %v569 = vunpack.c.l.b16 %v235
    %v570 = vunpack.c.h.b16 %v235
    %v571 = vunpack.c.l.b16 %v236
    %v572 = vunpack.c.l.b16 %v237
    %v573 = vunpack.c.h.b16 %v237
    %v574 = vunpack.c.l.b16 %v238
    %v575 = vunpack.c.h.b16 %v238
    %v576 = vunpack.c.l.b16 %v239
    %v577 = vunpack.c.h.b16 %v239
    %v578 = vunpack.c.l.b16 %v240
    %v579 = vunpack.c.l.b16 %v241
    %v580 = vunpack.c.h.b16 %v241
    %v581 = vunpack.c.l.b16 %v242
    %v582 = vunpack.c.h.b16 %v242
    %v583 = vunpack.c.l.b16 %v243
    %v584 = vunpack.c.h.b16 %v243
    %v585 = vunpack.c.l.b16 %v244
    %v586 = vunpack.c.l.b16 %v245
    %v587 = vunpack.c.h.b16 %v245
    %v588 = vunpack.c.l.b16 %v246
    %v589 = vunpack.c.h.b16 %v246
    %v590 = vunpack.c.l.b16 %v247
    %v591 = vunpack.c.h.b16 %v247
    %v592 = vunpack.c.l.b16 %v248
    %v593 = vunpack.c.l.b16 %v249
    %v594 = vunpack.c.h.b16 %v249
    %v595 = vunpack.c.l.b16 %v250
    %v596 = vunpack.c.h.b16 %v250
    %v597 = vunpack.c.l.b16 %v251
    %v598 = vunpack.c.h.b16 %v251
    %v599 = vunpack.c.l.b16 %v252
    %v600 = vunpack.c.l.b16 %v253
    %v601 = vunpack.c.h.b16 %v253
    %v602 = vunpack.c.l.b16 %v254
    %v603 = vunpack.c.h.b16 %v254
    %v604 = vunpack.c.l.b16 %v255
    %v605 = vunpack.c.h.b16 %v255
    %v606 = vunpack.c.l.b16 %v256
    %v607 = vunpack.c.l.b16 %v257
    %v608 = vunpack.c.h.b16 %v257
    %v609 = vunpack.c.l.b16 %v258
    %v610 = vunpack.c.h.b16 %v258
    %v611 = vunpack.c.l.b16 %v259
    %v612 = vunpack.c.h.b16 %v259
    %v613 = vunpack.c.l.b16 %v260
    %v614 = vunpack.c.l.b16 %v261
    %v615 = vunpack.c.h.b16 %v261
    %v616 = vunpack.c.l.b16 %v262
    %v617 = vunpack.c.h.b16 %v262
    %v618 = vunpack.c.l.b16 %v263
    %v619 = vunpack.c.h.b16 %v263
    %v620 = vunpack.c.l.b16 %v264
    %v621 = vunpack.c.l.b16 %v265
    %v622 = vunpack.c.h.b16 %v265
    %v623 = vunpack.c.l.b16 %v266
    %v624 = vunpack.c.h.b16 %v266
    %v625 = vunpack.c.l.b16 %v267
    %v626 = vunpack.c.h.b16 %v267
    %v627 = vunpack.c.l.b16 %v268
    %v628 = vunpack.c.l.b16 %v269
    %v629 = vunpack.c.h.b16 %v269
    %v630 = vunpack.c.l.b16 %v270
    %v631 = vunpack.c.h.b16 %v270
    %v632 = vunpack.c.l.b16 %v271
    %v633 = vunpack.c.h.b16 %v271
    %v634 = vunpack.c.l.b16 %v272
    %v635 = vunpack.c.l.b16 %v273
    %v636 = vunpack.c.h.b16 %v273
    %v637 = vunpack.c.l.b16 %v274
    %v638 = vunpack.c.h.b16 %v274
    %v639 = vunpack.c.l.b16 %v275
    %v640 = vunpack.c.h.b16 %v275
    %v641 = vunpack.c.l.b16 %v276
    %v642 = vunpack.c.l.b16 %v277
    %v643 = vunpack.c.h.b16 %v277
    %v644 = vunpack.c.l.b16 %v278
    %v645 = vunpack.c.h.b16 %v278
    %v646 = vunpack.c.l.b16 %v279
    %v647 = vunpack.c.h.b16 %v279
    %v648 = vunpack.c.l.b16 %v280
    %v649 = vunpack.c.l.b16 %v281
    %v650 = vunpack.c.h.b16 %v281
    %v651 = vunpack.c.l.b16 %v282
    %v652 = vunpack.c.h.b16 %v282
    %v653 = vunpack.c.l.b16 %v283
    %v654 = vunpack.c.h.b16 %v283
    %v655 = vunpack.c.l.b16 %v284
    %v656 = vunpack.c.l.b16 %v285
    %v657 = vunpack.c.h.b16 %v285
    %v658 = vunpack.c.l.b16 %v286
    %v659 = vunpack.c.h.b16 %v286
    %v660 = vunpack.c.l.b16 %v287
    %v661 = vunpack.c.h.b16 %v287
    %v662 = vunpack.c.l.b16 %v288
    %v663 = vunpack.c.l.b16 %v289
    %v664 = vunpack.c.h.b16 %v289
    %v665 = vunpack.c.l.b16 %v290
    %v666 = vunpack.c.h.b16 %v290
    %v667 = vunpack.c.l.b16 %v291
    %v668 = vunpack.c.h.b16 %v291
    %v669 = vunpack.c.l.b16 %v292
    %v670 = vunpack.c.l.b16 %v293
    %v671 = vunpack.c.h.b16 %v293
    %v672 = vunpack.c.l.b16 %v294
    %v673 = vunpack.c.h.b16 %v294
    %v674 = vunpack.c.l.b16 %v295
    %v675 = vunpack.c.h.b16 %v295
    %v676 = vunpack.c.l.b16 %v296
    %v677 = vunpack.c.l.b16 %v297
    %v678 = vunpack.c.h.b16 %v297
    %v679 = vunpack.c.l.b16 %v298
    %v680 = vunpack.c.h.b16 %v298
    %v681 = vunpack.c.l.b16 %v299
    %v682 = vunpack.c.h.b16 %v299
    %v683 = vunpack.c.l.b16 %v300
    %v684 = vunpack.c.l.b16 %v301
    %v685 = vunpack.c.h.b16 %v301
    %v686 = vunpack.c.l.b16 %v302
    %v687 = vunpack.c.h.b16 %v302
    %v688 = vunpack.c.l.b16 %v303
    %v689 = vunpack.c.h.b16 %v303
    %v690 = vunpack.c.l.b16 %v304
    %v691 = vunpack.c.l.b16 %v305
    %v692 = vunpack.c.h.b16 %v305
    %v693 = vunpack.c.l.b16 %v306
    %v694 = vunpack.c.h.b16 %v306
    %v695 = vunpack.c.l.b16 %v307
    %v696 = vunpack.c.h.b16 %v307
    %v697 = vunpack.c.l.b16 %v308
    %v698 = vpack.c.b16 %v481, %v474
    %v699 = vpack.c.b16 %v482, %v475
    %v700 = vpack.c.b16 %v483, %v476
    %v701 = vpack.c.b16 %v484, %v477
    %v702 = vpack.c.b16 %v485, %v478
    %v703 = vpack.c.b16 %v486, %v479
    %v704 = vpack.c.b16 %v487, %v480
    %v705 = vpack.c.b16 %v495, %v488
    %v706 = vpack.c.b16 %v496, %v489
    %v707 = vpack.c.b16 %v497, %v490
    %v708 = vpack.c.b16 %v498, %v491
    %v709 = vpack.c.b16 %v499, %v492
    %v710 = vpack.c.b16 %v500, %v493
    %v711 = vpack.c.b16 %v501, %v494
    %v712 = vpack.c.b16 %v509, %v502
    %v713 = vpack.c.b16 %v510, %v503
    %v714 = vpack.c.b16 %v511, %v504
    %v715 = vpack.c.b16 %v512, %v505
    %v716 = vpack.c.b16 %v513, %v506
    %v717 = vpack.c.b16 %v514, %v507
    %v718 = vpack.c.b16 %v515, %v508
    %v719 = vpack.c.b16 %v523, %v516
    %v720 = vpack.c.b16 %v524, %v517
    %v721 = vpack.c.b16 %v525, %v518
    %v722 = vpack.c.b16 %v526, %v519
    %v723 = vpack.c.b16 %v527, %v520
    %v724 = vpack.c.b16 %v528, %v521
    %v725 = vpack.c.b16 %v529, %v522
    %v726 = vpack.c.b16 %v537, %v530
    %v727 = vpack.c.b16 %v538, %v531
    %v728 = vpack.c.b16 %v539, %v532
    %v729 = vpack.c.b16 %v540, %v533
    %v730 = vpack.c.b16 %v541, %v534
    %v731 = vpack.c.b16 %v542, %v535
    %v732 = vpack.c.b16 %v543, %v536
    %v733 = vpack.c.b16 %v551, %v544
    %v734 = vpack.c.b16 %v552, %v545
    %v735 = vpack.c.b16 %v553, %v546
    %v736 = vpack.c.b16 %v554, %v547
    %v737 = vpack.c.b16 %v555, %v548
    %v738 = vpack.c.b16 %v556, %v549
    %v739 = vpack.c.b16 %v557, %v550
    %v740 = vpack.c.b16 %v565, %v558
    %v741 = vpack.c.b16 %v566, %v559
    %v742 = vpack.c.b16 %v567, %v560
    %v743 = vpack.c.b16 %v568, %v561
    %v744 = vpack.c.b16 %v569, %v562
    %v745 = vpack.c.b16 %v570, %v563
    %v746 = vpack.c.b16 %v571, %v564
    %v747 = vpack.c.b16 %v579, %v572
    %v748 = vpack.c.b16 %v580, %v573
    %v749 = vpack.c.b16 %v581, %v574
    %v750 = vpack.c.b16 %v582, %v575
    %v751 = vpack.c.b16 %v583, %v576
    %v752 = vpack.c.b16 %v584, %v577
    %v753 = vpack.c.b16 %v585, %v578
    %v754 = vpack.c.b16 %v593, %v586
    %v755 = vpack.c.b16 %v594, %v587
    %v756 = vpack.c.b16 %v595, %v588
    %v757 = vpack.c.b16 %v596, %v589
    %v758 = vpack.c.b16 %v597, %v590
    %v759 = vpack.c.b16 %v598, %v591
    %v760 = vpack.c.b16 %v599, %v592
    %v761 = vpack.c.b16 %v607, %v600
    %v762 = vpack.c.b16 %v608, %v601
    %v763 = vpack.c.b16 %v609, %v602
    %v764 = vpack.c.b16 %v610, %v603
    %v765 = vpack.c.b16 %v611, %v604
    %v766 = vpack.c.b16 %v612, %v605
    %v767 = vpack.c.b16 %v613, %v606
    %v768 = vpack.c.b16 %v621, %v614
    %v769 = vpack.c.b16 %v622, %v615
    %v770 = vpack.c.b16 %v623, %v616
    %v771 = vpack.c.b16 %v624, %v617
    %v772 = vpack.c.b16 %v625, %v618
    %v773 = vpack.c.b16 %v626, %v619
    %v774 = vpack.c.b16 %v627, %v620
    %v775 = vpack.c.b16 %v635, %v628
    %v776 = vpack.c.b16 %v636, %v629
    %v777 = vpack.c.b16 %v637, %v630
    %v778 = vpack.c.b16 %v638, %v631
    %v779 = vpack.c.b16 %v639, %v632
    %v780 = vpack.c.b16 %v640, %v633
    %v781 = vpack.c.b16 %v641, %v634
    %v782 = vpack.c.b16 %v649, %v642
    %v783 = vpack.c.b16 %v650, %v643
    %v784 = vpack.c.b16 %v651, %v644
    %v785 = vpack.c.b16 %v652, %v645
    %v786 = vpack.c.b16 %v653, %v646
    %v787 = vpack.c.b16 %v654, %v647
    %v788 = vpack.c.b16 %v655, %v648
    %v789 = vpack.c.b16 %v663, %v656
    %v790 = vpack.c.b16 %v664, %v657
    %v791 = vpack.c.b16 %v665, %v658
    %v792 = vpack.c.b16 %v666, %v659
    %v793 = vpack.c.b16 %v667, %v660
    %v794 = vpack.c.b16 %v668, %v661
    %v795 = vpack.c.b16 %v669, %v662
    %v796 = vpack.c.b16 %v677, %v670
    %v797 = vpack.c.b16 %v678, %v671
    %v798 = vpack.c.b16 %v679, %v672
    %v799 = vpack.c.b16 %v680, %v673
    %v800 = vpack.c.b16 %v681, %v674
    %v801 = vpack.c.b16 %v682, %v675
    %v802 = vpack.c.b16 %v683, %v676
    %v803 = vpack.c.b16 %v691, %v684
    %v804 = vpack.c.b16 %v692, %v685
    %v805 = vpack.c.b16 %v693, %v686
    %v806 = vpack.c.b16 %v694, %v687
    %v807 = vpack.c.b16 %v695, %v688
    %v808 = vpack.c.b16 %v696, %v689
    %v809 = vpack.c.b16 %v697, %v690
    %922 = vmatprep.subr.bf16.mxu0 %v748
    %923 = vmatpush1.bf16.msra.mxu0 %v747
    %924 = vmatprep.subr.bf16.mxu0 %v741
    %925 = vmatpush1.bf16.msra.mxu0 %v740
    %926 = vmatprep.subr.bf16.mxu0 %v734
    %927 = vmatpush1.bf16.msra.mxu0 %v733
    %928 = vmatprep.subr.bf16.mxu0 %v727
    %929 = vmatpush1.bf16.msra.mxu0 %v726
    %930 = vmatprep.subr.bf16.mxu0 %v720
    %931 = vmatpush1.bf16.msra.mxu0 %v719
    %932 = vmatprep.subr.bf16.mxu0 %v713
    %933 = vmatpush1.bf16.msra.mxu0 %v712
    %934 = vmatprep.subr.bf16.mxu0 %v706
    %935 = vmatpush1.bf16.msra.mxu0 %v705
    %936 = vmatprep.subr.bf16.mxu0 %v699
    %937 = vmatpush1.bf16.msra.mxu0 %v698
    %938 = vmatprep.subr.bf16.mxu0 %v804
    %939 = vmatpush2.bf16.msra.mxu0 %v803
    %940 = vmatprep.subr.bf16.mxu0 %v797
    %941 = vmatpush2.bf16.msra.mxu0 %v796
    %942 = vmatprep.subr.bf16.mxu0 %v790
    %943 = vmatpush2.bf16.msra.mxu0 %v789
    %944 = vmatprep.subr.bf16.mxu0 %v783
    %945 = vmatpush2.bf16.msra.mxu0 %v782
    %946 = vmatprep.subr.bf16.mxu0 %v776
    %947 = vmatpush2.bf16.msra.mxu0 %v775
    %948 = vmatprep.subr.bf16.mxu0 %v769
    %949 = vmatpush2.bf16.msra.mxu0 %v768
    %950 = vmatprep.subr.bf16.mxu0 %v762
    %951 = vmatpush2.bf16.msra.mxu0 %v761
    %952 = vmatprep.subr.bf16.mxu0 %v755
    %953 = vmatpush2.bf16.msra.mxu0 %v754
    %954 = vmatprep.mubr.bf16.mxu0 %v180
    %955 = vmatmul.mubr.bf16.gmra.mxu0 %v179
    %v956 = vpop.f32.mrf.mxu0
    %v957 = vadd.f32 %v314, %v956
    %v958 = vpop.f32.mrf.mxu0
    %v959 = vadd.f32 %v318, %v958
    %v960 = vpop.f32.mrf.mxu0
    %v961 = vpop.f32.mrf.mxu0
    %962 = vdwg.mxu0
    %963 = vmatprep.subr.bf16.mxu0 %v750
    %964 = vmatpush1.bf16.msra.mxu0 %v749
    %965 = vmatprep.subr.bf16.mxu0 %v743
    %966 = vmatpush1.bf16.msra.mxu0 %v742
    %967 = vmatprep.subr.bf16.mxu0 %v736
    %968 = vmatpush1.bf16.msra.mxu0 %v735
    %969 = vmatprep.subr.bf16.mxu0 %v729
    %970 = vmatpush1.bf16.msra.mxu0 %v728
    %971 = vmatprep.subr.bf16.mxu0 %v722
    %972 = vmatpush1.bf16.msra.mxu0 %v721
    %973 = vmatprep.subr.bf16.mxu0 %v715
    %974 = vmatpush1.bf16.msra.mxu0 %v714
    %975 = vmatprep.subr.bf16.mxu0 %v708
    %976 = vmatpush1.bf16.msra.mxu0 %v707
    %977 = vmatprep.subr.bf16.mxu0 %v701
    %978 = vmatpush1.bf16.msra.mxu0 %v700
    %979 = vmatprep.subr.bf16.mxu0 %v806
    %980 = vmatpush2.bf16.msra.mxu0 %v805
    %981 = vmatprep.subr.bf16.mxu0 %v799
    %982 = vmatpush2.bf16.msra.mxu0 %v798
    %983 = vmatprep.subr.bf16.mxu0 %v792
    %984 = vmatpush2.bf16.msra.mxu0 %v791
    %985 = vmatprep.subr.bf16.mxu0 %v785
    %986 = vmatpush2.bf16.msra.mxu0 %v784
    %987 = vmatprep.subr.bf16.mxu0 %v778
    %988 = vmatpush2.bf16.msra.mxu0 %v777
    %989 = vmatprep.subr.bf16.mxu0 %v771
    %990 = vmatpush2.bf16.msra.mxu0 %v770
    %991 = vmatprep.subr.bf16.mxu0 %v764
    %992 = vmatpush2.bf16.msra.mxu0 %v763
    %993 = vmatprep.subr.bf16.mxu0 %v757
    %994 = vmatpush2.bf16.msra.mxu0 %v756
    %995 = vmatprep.mubr.bf16.mxu0 %v180
    %996 = vmatmul.mubr.bf16.gmra.mxu0 %v179
    %v997 = vpop.f32.mrf.mxu0
    %v998 = vadd.f32 %v322, %v997
    %v999 = vpop.f32.mrf.mxu0
    %v1000 = vadd.f32 %v326, %v999
    %v1001 = vpop.f32.mrf.mxu0
    %v1002 = vpop.f32.mrf.mxu0
    %1003 = vdwg.mxu0
    %1004 = vmatprep.subr.bf16.mxu0 %v752
    %1005 = vmatpush1.bf16.msra.mxu0 %v751
    %1006 = vmatprep.subr.bf16.mxu0 %v745
    %1007 = vmatpush1.bf16.msra.mxu0 %v744
    %1008 = vmatprep.subr.bf16.mxu0 %v738
    %1009 = vmatpush1.bf16.msra.mxu0 %v737
    %1010 = vmatprep.subr.bf16.mxu0 %v731
    %1011 = vmatpush1.bf16.msra.mxu0 %v730
    %1012 = vmatprep.subr.bf16.mxu0 %v724
    %1013 = vmatpush1.bf16.msra.mxu0 %v723
    %1014 = vmatprep.subr.bf16.mxu0 %v717
    %1015 = vmatpush1.bf16.msra.mxu0 %v716
    %1016 = vmatprep.subr.bf16.mxu0 %v710
    %1017 = vmatpush1.bf16.msra.mxu0 %v709
    %1018 = vmatprep.subr.bf16.mxu0 %v703
    %1019 = vmatpush1.bf16.msra.mxu0 %v702
    %1020 = vmatprep.subr.bf16.mxu0 %v808
    %1021 = vmatpush2.bf16.msra.mxu0 %v807
    %1022 = vmatprep.subr.bf16.mxu0 %v801
    %1023 = vmatpush2.bf16.msra.mxu0 %v800
    %1024 = vmatprep.subr.bf16.mxu0 %v794
    %1025 = vmatpush2.bf16.msra.mxu0 %v793
    %1026 = vmatprep.subr.bf16.mxu0 %v787
    %1027 = vmatpush2.bf16.msra.mxu0 %v786
    %1028 = vmatprep.subr.bf16.mxu0 %v780
    %1029 = vmatpush2.bf16.msra.mxu0 %v779
    %1030 = vmatprep.subr.bf16.mxu0 %v773
    %1031 = vmatpush2.bf16.msra.mxu0 %v772
    %1032 = vmatprep.subr.bf16.mxu0 %v766
    %1033 = vmatpush2.bf16.msra.mxu0 %v765
    %1034 = vmatprep.subr.bf16.mxu0 %v759
    %1035 = vmatpush2.bf16.msra.mxu0 %v758
    %1036 = vmatprep.mubr.bf16.mxu0 %v180
    %1037 = vmatmul.mubr.bf16.gmra.mxu0 %v179
    %v1038 = vpop.f32.mrf.mxu0
    %v1039 = vadd.f32 %v330, %v1038
    %v1040 = vpop.f32.mrf.mxu0
    %v1041 = vadd.f32 %v334, %v1040
    %v1042 = vpop.f32.mrf.mxu0
    %v1043 = vpop.f32.mrf.mxu0
    %1044 = vdwg.mxu0
    %1045 = vmatprep.subr.bf16.mxu0 0
    %1046 = vmatpush1.bf16.msra.mxu0 %v753
    %1047 = vmatprep.subr.bf16.mxu0 0
    %1048 = vmatpush1.bf16.msra.mxu0 %v746
    %1049 = vmatprep.subr.bf16.mxu0 0
    %1050 = vmatpush1.bf16.msra.mxu0 %v739
    %1051 = vmatprep.subr.bf16.mxu0 0
    %1052 = vmatpush1.bf16.msra.mxu0 %v732
    %1053 = vmatprep.subr.bf16.mxu0 0
    %1054 = vmatpush1.bf16.msra.mxu0 %v725
    %1055 = vmatprep.subr.bf16.mxu0 0
    %1056 = vmatpush1.bf16.msra.mxu0 %v718
    %1057 = vmatprep.subr.bf16.mxu0 0
    %1058 = vmatpush1.bf16.msra.mxu0 %v711
    %1059 = vmatprep.subr.bf16.mxu0 0
    %1060 = vmatpush1.bf16.msra.mxu0 %v704
    %1061 = vmatprep.subr.bf16.mxu0 0
    %1062 = vmatpush2.bf16.msra.mxu0 %v809
    %1063 = vmatprep.subr.bf16.mxu0 0
    %1064 = vmatpush2.bf16.msra.mxu0 %v802
    %1065 = vmatprep.subr.bf16.mxu0 0
    %1066 = vmatpush2.bf16.msra.mxu0 %v795
    %1067 = vmatprep.subr.bf16.mxu0 0
    %1068 = vmatpush2.bf16.msra.mxu0 %v788
    %1069 = vmatprep.subr.bf16.mxu0 0
    %1070 = vmatpush2.bf16.msra.mxu0 %v781
    %1071 = vmatprep.subr.bf16.mxu0 0
    %1072 = vmatpush2.bf16.msra.mxu0 %v774
    %1073 = vmatprep.subr.bf16.mxu0 0
    %1074 = vmatpush2.bf16.msra.mxu0 %v767
    %1075 = vmatprep.subr.bf16.mxu0 0
    %1076 = vmatpush2.bf16.msra.mxu0 %v760
    %1077 = vmatprep.mubr.bf16.mxu0 %v180
    %1078 = vmatmul.mubr.bf16.gmra.mxu0 %v179
    %v1079 = vpop.f32.mrf.mxu0
    %v1080 = vadd.f32 %v338, %v1079
    %v1081 = vpop.f32.mrf.mxu0
    %v1082 = vpop.f32.mrf.mxu0
    %v1083 = vpop.f32.mrf.mxu0
    %1084 = vdwg.mxu0
    %v1085 = vtanh.pop %v957
    %v1086 = vtanh.pop %v959
    %v1087 = vtanh.pop %v998
    %v1088 = vtanh.pop %v1000
    %v1089 = vtanh.pop %v1039
    %v1090 = vtanh.pop %v1041
    %v1091 = vtanh.pop %v1080
    %1092 = vst [vmem:[#allocation2] sm:$0xff] %v1085
    %1093 = vst [vmem:[#allocation2 + $0x8] sm:$0xff] %v1086
    %1094 = vst [vmem:[#allocation2 + $0x10] sm:$0xff] %v1087
    %1095 = vst [vmem:[#allocation2 + $0x18] sm:$0xff] %v1088
    %1096 = vst [vmem:[#allocation2 + $0x20] sm:$0xff] %v1089
    %1097 = vst [vmem:[#allocation2 + $0x28] sm:$0xff] %v1090
    %vm1098 = vcmask 130048
    %1099 = vst.msk [vmem:[#allocation2 + $0x30] sm:$0xff] %vm1098, %v1091
    // Predicated region
    $region22: #{generator_forward.1} parent=1 // pred_check
      _
    $region23: #{generator_forward.1} parent=1 // pred_check_branch
      %1101 = sbr.rel (0) target = $region25
    $region24: #{generator_forward.1} parent=1 // pred_region
      %s1103 = ssub.s32 896, 896
      %1104 = vsyncadd [#allocation3], %s1103
      %s1106 = sshll.u32 [#allocation2], 4
      %s1107 = int_to_ptr.vmem [resolvable:$true] %s1106
      %1109 = dma.vmem_to_hbm [thread:$0]  %s1107, 896, %s5, [#allocation3]
    $region25: #{generator_forward.1} parent=1 // pred_fallthru
      _
    // Predicated region
    $region26: #{generator_forward.1} parent=1 // pred_check
      _
    $region27: #{generator_forward.1} parent=1 // pred_check_branch
      %1111 = sbr.rel (0) target = $region29
    $region28: #{generator_forward.1} parent=1 // pred_region
      %1112 = dma.done [#allocation3], 896
    $region29: #{generator_forward.1} parent=1 // pred_fallthru
      _
    %1113 = vsyncpa [#allocation3], 1

</llo_original>
